<compile_context>
chip_gen: v6e
topology: v6e:2x2x1
jax: 0.10.0
libtpu: 0.0.40
codegen_flags: <defaults>
</compile_context>

<pallas_src>
import functools

import jax
import jax.numpy as jnp
import numpy as np
from jax import lax
from jax.experimental import pallas as pl
from jax.experimental.pallas import tpu as pltpu


def spacc_kernel(x_ref, sp_ref, avg_ref, acc_ref, cnt_ref, *, tk, compute_dtype):
    # x_ref:   (1, C, TP)   features in their input dtype (cast per-tile below)
    # sp_ref:  (1, TP, 1)   int32 labels; padded pixels carry -1
    # avg_ref: (1, C, Kpad) output averages
    # acc_ref: (C, Kpad)    float32 per-superpixel feature sums
    # cnt_ref: (1, Kpad)    float32 per-superpixel pixel counts
    pt = pl.program_id(1)

    @pl.when(pt == 0)
    def _init():
        acc_ref[...] = jnp.zeros_like(acc_ref)
        cnt_ref[...] = jnp.zeros_like(cnt_ref)

    x_tile = x_ref[0].astype(compute_dtype)        # (C, TP) cast in VMEM (cheap)
    sp = sp_ref[0]                                 # (TP, 1) int32
    tp = sp.shape[0]
    kpad = acc_ref.shape[1]
    ones_row = jnp.ones((1, tp), compute_dtype)    # counts lhs (exact in bf16)

    # Chunk the one-hot over the superpixel (lane) axis: the live (TP, TK)
    # intermediate stays sub-MiB-ish, so the VPU compare/cast of chunk i+1 can
    # overlap the MXU dot of chunk i and VMEM pressure stays low.
    for k0 in range(0, kpad, tk):
        labels = k0 + lax.broadcasted_iota(jnp.int32, (1, tk), 1)   # (1, TK)
        onehot = (sp == labels).astype(compute_dtype)               # (TP, TK)
        acc_ref[:, k0:k0 + tk] += lax.dot_general(
            x_tile, onehot, (((1,), (0,)), ((), ())),
            preferred_element_type=jnp.float32)                     # (C, TK)
        cnt_ref[:, k0:k0 + tk] += lax.dot_general(
            ones_row, onehot, (((1,), (0,)), ((), ())),
            preferred_element_type=jnp.float32)                     # (1, TK)

    @pl.when(pt == pl.num_programs(1) - 1)
    def _finalize():
        counts = cnt_ref[...]
        inv = jnp.where(counts > 0.0, 1.0 / jnp.maximum(counts, 1.0), 0.0)
        avg_ref[0] = (acc_ref[...] * inv).astype(avg_ref.dtype)


def _round_up(x, m):
    return (x + m - 1) // m * m


def _vmem_budget_bytes():
    """Per-TensorCore VMEM budget (half of capacity, capped at 64 MiB)."""
    cap = None
    try:
        info = pltpu.get_tpu_info()
        cap = getattr(info, "vmem_capacity_bytes", None)
    except Exception:
        cap = None
    if not cap:
        cap = 64 << 20          # conservative: v7x per-core VMEM
    return int(min(cap // 2, 64 << 20))


def _choose_k_chunk(kpad):
    for tk in (512, 384, 256, 128):
        if kpad % tk == 0:
            return tk
    return 128


def _choose_tiles(p, c, kpad, x_bytes, cd_bytes, out_bytes, budget):
    """Pick (pixel tile TP, K chunk TK) to fit the VMEM budget."""
    tk = _choose_k_chunk(kpad)
    # Bytes that do not scale with the pixel tile.
    fixed = (c * kpad * 4                  # f32 sums accumulator
             + 8 * kpad * 4                # f32 counts accumulator (sublane pad)
             + 2 * c * kpad * out_bytes    # double-buffered output block
             + (4 << 20))                  # compiler-internal scratch headroom
    # Bytes per pixel of the tile.
    per_px = (2 * c * x_bytes              # double-buffered x block
              + 2 * 128 * 4                # double-buffered (TP,1) i32 labels (lane pad)
              + c * cd_bytes               # in-kernel cast copy of the x tile
              + 2 * tk * cd_bytes)         # live one-hot chunk (+1 for overlap)
    tp = (budget - fixed) // per_px
    tp = max(128, min((int(tp) // 128) * 128, 8192))
    tp = min(tp, _round_up(p, 128))
    # Prefer a tile that divides P exactly: then x is passed through with zero
    # HBM copies (no jnp.pad). Only give up at most 4x tile size for this.
    if p % tp != 0:
        for cand in range(tp, 127, -128):
            if p % cand == 0 and cand * 4 >= tp:
                tp = cand
                break
    return tp, tk


@functools.partial(jax.jit, static_argnames=("kpad", "compute_dtype"))
def _sp_acc_av_call(x_nchw, sp_nhw, *, kpad, compute_dtype):
    n, c, h, w = x_nchw.shape
    p = h * w
    out_dtype = x_nchw.dtype
    cd = jnp.dtype(out_dtype) if compute_dtype is None else jnp.dtype(compute_dtype)

    budget = _vmem_budget_bytes()
    tp, tk = _choose_tiles(
        p, c, kpad,
        x_bytes=jnp.dtype(out_dtype).itemsize,
        cd_bytes=cd.itemsize,
        out_bytes=jnp.dtype(out_dtype).itemsize,
        budget=budget)
    p_pad = _round_up(p, tp)

    # Features: free reshape to (N, C, P); no cast, no ones row, no copy unless
    # the pixel axis genuinely needs padding.
    x = x_nchw.reshape(n, c, p)
    if p_pad != p:
        x = jnp.pad(x, ((0, 0), (0, 0), (0, p_pad - p)))

    # Labels as an (N, P, 1) column so each kernel tile is (TP, 1) with pixels
    # on the sublane axis (the one-hot then has K on lanes). Padded pixels get
    # -1, which matches no superpixel, so they contribute to nothing.
    sp = sp_nhw.reshape(n, p, 1).astype(jnp.int32)
    if p_pad != p:
        sp = jnp.pad(sp, ((0, 0), (0, p_pad - p), (0, 0)), constant_values=-1)

    kernel = functools.partial(spacc_kernel, tk=tk, compute_dtype=cd)

    return pl.pallas_call(
        kernel,
        out_shape=jax.ShapeDtypeStruct((n, c, kpad), out_dtype),
        grid_spec=pltpu.PrefetchScalarGridSpec(
            num_scalar_prefetch=0,
            grid=(n, p_pad // tp),
            in_specs=[
                pl.BlockSpec((1, c, tp), lambda i, j: (i, 0, j)),
                pl.BlockSpec((1, tp, 1), lambda i, j: (i, j, 0)),
            ],
            out_specs=pl.BlockSpec((1, c, kpad), lambda i, j: (i, 0, 0)),
            scratch_shapes=[
                pltpu.VMEM((c, kpad), jnp.float32),   # sums accumulator
                pltpu.VMEM((1, kpad), jnp.float32),   # counts accumulator
            ],
        ),
        compiler_params=pltpu.CompilerParams(
            dimension_semantics=("parallel", "arbitrary"),
            vmem_limit_bytes=int(budget),
        ),
    )(x, sp)


def sp_acc_av(input_nchw, superpixels_nhw, num_superpixels=None,
              compute_dtype=jnp.bfloat16):
    """Forward pass of SpAccAvModule.

    input_nchw:       (N, C, H, W) float features
    superpixels_nhw:  (N, H, W)    integer labels in [0, max_sp]
    num_superpixels:  optional static K = max_sp + 1. If given, the per-call
                      device->host sync on max(superpixels) is skipped and the
                      op composes cleanly with outer jit / training loops.
    compute_dtype:    matmul operand dtype. Default bfloat16 (one-hot exact;
                      features rounded to bf16 - small documented precision
                      change) for native MXU rate. Pass None to use the input
                      dtype. Sums/counts always accumulate in float32.
    returns:          (N, C, K) per-superpixel averages (0 for empty labels).

    Note: labels outside [0, K-1] (e.g. genuinely negative labels) are silently
    dropped from both sums and counts.
    """
    if num_superpixels is None:
        # Data-dependent, exactly like int(torch.max(superpixels)) in the torch
        # op. Kpad is 128-bucketed so recompiles are rare.
        num_superpixels = int(jax.device_get(jnp.max(superpixels_nhw))) + 1
    k = int(num_superpixels)
    kpad = _round_up(k, 128)
    out = _sp_acc_av_call(input_nchw, superpixels_nhw,
                          kpad=kpad, compute_dtype=compute_dtype)
    return out[:, :, :k]


if __name__ == "__main__":
    key = jax.random.PRNGKey(0)
    kx, ks = jax.random.split(key)

    N, C, H, W = 2, 4, 16, 16
    MAX_LABEL = 15                      # labels in [0, 15]
    K = MAX_LABEL + 1

    x = jax.random.normal(kx, (N, C, H, W), dtype=jnp.float32)
    sp = jax.random.randint(ks, (N, H, W), 0, MAX_LABEL + 1, dtype=jnp.int32)

    # Host float64 reference (empty superpixels -> 0).
    sp_np = np.asarray(sp).reshape(N, H * W)
    x_np = np.asarray(x, dtype=np.float64).reshape(N, C, H * W)
    ref = np.zeros((N, C, K), dtype=np.float64)
    for nn in range(N):
        for kk in range(K):
            m = sp_np[nn] == kk
            if m.any():
                ref[nn, :, kk] = x_np[nn][:, m].mean(axis=1)

    # Default fast path: static K, bf16 MXU operands, f32 accumulation.
    out = jax.block_until_ready(sp_acc_av(x, sp, num_superpixels=K))
    assert out.shape == (N, C, K), out.shape
    np.testing.assert_allclose(np.asarray(out, dtype=np.float64), ref,
                               rtol=5e-2, atol=5e-2)

    # Input-dtype (f32) operand path; tolerance accommodates the MXU's
    # multi-pass bf16 handling of f32 operands on some generations.
    out_f32 = jax.block_until_ready(
        sp_acc_av(x, sp, num_superpixels=K, compute_dtype=None))
    np.testing.assert_allclose(np.asarray(out_f32, dtype=np.float64), ref,
                               rtol=1e-2, atol=1e-2)

    # Torch-like data-dependent K path (device_get of max label).
    out_auto = jax.block_until_ready(sp_acc_av(x, sp))
    k_auto = int(sp_np.max()) + 1
    assert out_auto.shape == (N, C, k_auto), out_auto.shape
    np.testing.assert_allclose(np.asarray(out_auto, dtype=np.float64),
                               ref[:, :, :k_auto], rtol=5e-2, atol=5e-2)

    print("KERNEL_OK")
</pallas_src>

<mosaic_0001>
module attributes {stable_mosaic.version = 11 : i64} {
  func.func @spacc_kernel(%arg0: i32, %arg1: i32, %arg2: memref<1x4x256xf32, #tpu.memory_space<vmem>>, %arg3: memref<1x256x1xi32, #tpu.memory_space<vmem>>, %arg4: memref<1x4x128xf32, #tpu.memory_space<vmem>>, %arg5: memref<4x128xf32, #tpu.memory_space<vmem>>, %arg6: memref<1x128xf32, #tpu.memory_space<vmem>>) attributes {dimension_semantics = [#tpu.dimension_semantics<parallel>, #tpu.dimension_semantics<arbitrary>], iteration_bounds = array<i64: 2, 1>, scalar_prefetch = 0 : i64, scratch_operands = 2 : i64, tpu.core_type = #tpu.core_type<tc>, window_params = [{transform_indices = @transform_0, window_bounds = array<i64: 1, 4, 256>}, {transform_indices = @transform_1, window_bounds = array<i64: 1, 256, 1>}, {transform_indices = @transform_2, window_bounds = array<i64: 1, 4, 128>}]} {
    %c0_i32 = arith.constant 0 : i32
    %0 = arith.cmpi eq, %arg1, %c0_i32 : i32
    %1 = arith.extui %0 : i1 to i32
    %c0_i32_0 = arith.constant 0 : i32
    %2 = arith.cmpi ne, %1, %c0_i32_0 : i32
    scf.if %2 {
      %cst_19 = arith.constant 0.000000e+00 : f32
      %29 = vector.broadcast %cst_19 : f32 to vector<4x128xf32>
      %c0_20 = arith.constant 0 : index
      %c0_21 = arith.constant 0 : index
      %30 = vector.load %arg5[%c0_20, %c0_21] : memref<4x128xf32, #tpu.memory_space<vmem>>, vector<4x128xf32>
      tpu.vector_store %arg5[%c0_20, %c0_21], %29 {strides = array<i32>} : memref<4x128xf32, #tpu.memory_space<vmem>>, vector<4x128xf32>,
      %cst_22 = arith.constant 0.000000e+00 : f32
      %31 = vector.broadcast %cst_22 : f32 to vector<1x128xf32>
      %c0_23 = arith.constant 0 : index
      %c0_24 = arith.constant 0 : index
      %32 = vector.load %arg6[%c0_23, %c0_24] : memref<1x128xf32, #tpu.memory_space<vmem>>, vector<1x128xf32>
      tpu.vector_store %arg6[%c0_23, %c0_24], %31 {strides = array<i32>} : memref<1x128xf32, #tpu.memory_space<vmem>>, vector<1x128xf32>,
    } else {
    }
    %c0 = arith.constant 0 : index
    %c0_1 = arith.constant 0 : index
    %c0_2 = arith.constant 0 : index
    %3 = vector.load %arg2[%c0, %c0_1, %c0_2] : memref<1x4x256xf32, #tpu.memory_space<vmem>>, vector<1x4x256xf32>
    %4 = vector.shape_cast %3 : vector<1x4x256xf32> to vector<4x256xf32>
    %5 = arith.truncf %4 : vector<4x256xf32> to vector<4x256xbf16>
    %c0_3 = arith.constant 0 : index
    %c0_4 = arith.constant 0 : index
    %c0_5 = arith.constant 0 : index
    %6 = vector.load %arg3[%c0_3, %c0_4, %c0_5] : memref<1x256x1xi32, #tpu.memory_space<vmem>>, vector<1x256x1xi32>
    %7 = vector.shape_cast %6 : vector<1x256x1xi32> to vector<256x1xi32>
    %cst = arith.constant 1.000000e+00 : bf16
    %8 = vector.broadcast %cst : bf16 to vector<1x256xbf16>
    %9 = tpu.iota {dimensions = array<i32: 1>} : vector<1x128xi32>
    %c0_i32_6 = arith.constant 0 : i32
    %10 = vector.broadcast %c0_i32_6 : i32 to vector<1x128xi32>
    %11 = arith.addi %10, %9 : vector<1x128xi32>
    %12 = vector.broadcast %7 : vector<256x1xi32> to vector<256x128xi32>
    %13 = vector.broadcast %11 : vector<1x128xi32> to vector<256x128xi32>
    %14 = arith.cmpi eq, %12, %13 : vector<256x128xi32>
    %15 = arith.extui %14 : vector<256x128xi1> to vector<256x128xi32>
    %16 = arith.sitofp %15 : vector<256x128xi32> to vector<256x128xf32>
    %17 = arith.truncf %16 : vector<256x128xf32> to vector<256x128xbf16>
    %c0_7 = arith.constant 0 : index
    %c0_8 = arith.constant 0 : index
    %18 = vector.load %arg5[%c0_7, %c0_8] : memref<4x128xf32, #tpu.memory_space<vmem>>, vector<4x128xf32>
    %cst_9 = arith.constant dense<0.000000e+00> : vector<4x128xf32>
    %19 = tpu.matmul %5, %17, %cst_9 {dimension_numbers = #tpu.dot_dimension_numbers<[1], [0], [0], [1], [0, 0, 1, 1], [], []>} : vector<4x256xbf16>, vector<256x128xbf16>, vector<4x128xf32> -> vector<4x128xf32>
    %20 = arith.addf %18, %19 : vector<4x128xf32>
    %c0_10 = arith.constant 0 : index
    %c0_11 = arith.constant 0 : index
    %21 = vector.load %arg5[%c0_10, %c0_11] : memref<4x128xf32, #tpu.memory_space<vmem>>, vector<4x128xf32>
    tpu.vector_store %arg5[%c0_10, %c0_11], %20 {strides = array<i32>} : memref<4x128xf32, #tpu.memory_space<vmem>>, vector<4x128xf32>,
    %c0_12 = arith.constant 0 : index
    %c0_13 = arith.constant 0 : index
    %22 = vector.load %arg6[%c0_12, %c0_13] : memref<1x128xf32, #tpu.memory_space<vmem>>, vector<1x128xf32>
    %cst_14 = arith.constant dense<0.000000e+00> : vector<1x128xf32>
    %23 = tpu.matmul %8, %17, %cst_14 {dimension_numbers = #tpu.dot_dimension_numbers<[1], [0], [0], [1], [0, 0, 1, 1], [], []>} : vector<1x256xbf16>, vector<256x128xbf16>, vector<1x128xf32> -> vector<1x128xf32>
    %24 = arith.addf %22, %23 : vector<1x128xf32>
    %c0_15 = arith.constant 0 : index
    %c0_16 = arith.constant 0 : index
    %25 = vector.load %arg6[%c0_15, %c0_16] : memref<1x128xf32, #tpu.memory_space<vmem>>, vector<1x128xf32>
    tpu.vector_store %arg6[%c0_15, %c0_16], %24 {strides = array<i32>} : memref<1x128xf32, #tpu.memory_space<vmem>>, vector<1x128xf32>,
    %c0_i32_17 = arith.constant 0 : i32
    %26 = arith.cmpi eq, %arg1, %c0_i32_17 : i32
    %27 = arith.extui %26 : i1 to i32
    %c0_i32_18 = arith.constant 0 : i32
    %28 = arith.cmpi ne, %27, %c0_i32_18 : i32
    scf.if %28 {
      %c0_19 = arith.constant 0 : index
      %c0_20 = arith.constant 0 : index
      %29 = vector.load %arg6[%c0_19, %c0_20] : memref<1x128xf32, #tpu.memory_space<vmem>>, vector<1x128xf32>
      %cst_21 = arith.constant 0.000000e+00 : f32
      %30 = vector.broadcast %cst_21 : f32 to vector<1x128xf32>
      %31 = arith.cmpf ogt, %29, %30 : vector<1x128xf32>
      %cst_22 = arith.constant 1.000000e+00 : f32
      %32 = vector.broadcast %cst_22 : f32 to vector<1x128xf32>
      %33 = arith.maximumf %29, %32 : vector<1x128xf32>
      %cst_23 = arith.constant 1.000000e+00 : f32
      %34 = vector.broadcast %cst_23 : f32 to vector<1x128xf32>
      %35 = arith.divf %34, %33 : vector<1x128xf32>
      %cst_24 = arith.constant 0.000000e+00 : f32
      %36 = vector.broadcast %cst_24 : f32 to vector<1x128xf32>
      %37 = arith.select %31, %35, %36 : vector<1x128xi1>, vector<1x128xf32>
      %c0_25 = arith.constant 0 : index
      %c0_26 = arith.constant 0 : index
      %38 = vector.load %arg5[%c0_25, %c0_26] : memref<4x128xf32, #tpu.memory_space<vmem>>, vector<4x128xf32>
      %39 = vector.broadcast %37 : vector<1x128xf32> to vector<4x128xf32>
      %40 = arith.mulf %38, %39 : vector<4x128xf32>
      %c0_27 = arith.constant 0 : index
      %c0_28 = arith.constant 0 : index
      %c0_29 = arith.constant 0 : index
      %41 = vector.load %arg4[%c0_27, %c0_28, %c0_29] : memref<1x4x128xf32, #tpu.memory_space<vmem>>, vector<1x4x128xf32>
      %42 = vector.shape_cast %41 : vector<1x4x128xf32> to vector<4x128xf32>
      %43 = vector.shape_cast %40 : vector<4x128xf32> to vector<1x4x128xf32>
      tpu.vector_store %arg4[%c0_27, %c0_28, %c0_29], %43 {strides = array<i32>} : memref<1x4x128xf32, #tpu.memory_space<vmem>>, vector<1x4x128xf32>,
    } else {
    }
    return
  }
  func.func @transform_0(%arg0: i32, %arg1: i32) -> (i32, i32, i32) {
    %c0_i32 = arith.constant 0 : i32
    %c0_i32_0 = arith.constant 0 : i32
    return %arg0, %c0_i32, %arg1 : i32, i32, i32
  }
  func.func @transform_1(%arg0: i32, %arg1: i32) -> (i32, i32, i32) {
    %c0_i32 = arith.constant 0 : i32
    %c0_i32_0 = arith.constant 0 : i32
    return %arg0, %arg1, %c0_i32 : i32, i32, i32
  }
  func.func @transform_2(%arg0: i32, %arg1: i32) -> (i32, i32, i32) {
    %c0_i32 = arith.constant 0 : i32
    %c0_i32_0 = arith.constant 0 : i32
    %c0_i32_1 = arith.constant 0 : i32
    return %arg0, %c0_i32, %c0_i32_0 : i32, i32, i32
  }
}

</mosaic_0001>

<llo_original>
// kernel: _sp_acc_av_call.1
$region0: #{_sp_acc_av_call.1}
  #allocation0 [shape = 'u32[]', space=smem, size = 0x4, offset = 0x4, fixed_abs, tag = 'smem constant byte address 0x4 - core index']
  #allocation1 [shape = 'u32[144,128]{1,0:T(1,128)}', space=vmem, size = 0x12000, scoped, tag = 'internal scratch']
  #allocation2 [shape = 'f32[4,128]{1,0:T(4,128)}', space=vmem, size = 0x800, scoped, tag = 'scratch operand']
  #allocation3 [shape = 'f32[1,128]{1,0:T(1,128)}', space=vmem, size = 0x200, scoped, tag = 'scratch operand']
  %s0 = inlined_call_operand.vmem [shape: f32[2,4,256], index: 0, kind: input, shape index: {}]
  %s1 = inlined_call_operand.vmem [shape: s32[2,256,1], index: 1, kind: input, shape index: {}]
  %s2 = inlined_call_operand.hbm [shape: f32[2,4,128], index: 2, kind: output, shape index: {}]
  %s3 = sld [smem:[#allocation0]]
  $region49: #{_sp_acc_av_call.1} parent=0
    _
  %s5 = ssub.s32 1, %s3
  %s6 = scalar_select 0, %s5, %s3
  $region1: #{_sp_acc_av_call.1} parent=0
    #allocation4 [shape = 'u8[4096]{0}', space=vmem, size = 0x1000, scoped, tag = 'output window, operand 0']
    #allocation5 [shape = 's32[2]{0}', space=sflag, size = 0x8, scoped, tag = 'scoped memory for _sp_acc_av_call.1']
    %7 = vsyncpa [#allocation5], 0
    %s8 = scalar_lea.sflag [#allocation5], 1
    %9 = vsyncpa %s8, 0
    loop: start=0, step=1, limit=4
    $region2: #{_sp_acc_av_call.1} parent=1 // loop_pre_header
      _
    $region3: #{_sp_acc_av_call.1} parent=1 // loop_header
      %s11 = sphi 0, %s15
      %p12 = scmp.ge.s32.totalorder %s11, 4
      %s18 = sphi 0, %s30
      %s19 = sphi 0, %s26
      %s20 = sphi 0, %s18
      %s21 = sphi 0, %s19
      %s22 = sphi 0, %s20
      %s23 = sphi 0, %s21
      %s35 = sphi 0, %s37
      %s38 = sphi 0, %s35
      %s39 = sphi 0, %s38
      %s55 = sphi 0, %s39
      %s63 = sphi 0, %s65
      %s66 = sphi 0, %s63
      %s67 = sphi 0, %s66
      %s83 = sphi 0, %s67
      %s89 = sphi 0, %s91
      %s92 = sphi 0, %s89
      %s93 = sphi 0, %s92
      %s109 = sphi 0, %s93
    $region4: #{_sp_acc_av_call.1} parent=1 // loop_header_branch
      %14 = sbr.rel (%p12) target = $region8
    $region5: #{_sp_acc_av_call.1} parent=1 // loop_body
      %s16 = ssub.s32 %s11, 1
      %s17 = ssub.s32 %s11, 2
      %s24 = sadd.s32 1, %s19
      %p25 = scmp.ge.s32.totalorder %s24, 1
      %s26 = scalar_select %p25, 0, %s24
      %s27 = sadd.s32 1, %s18
      %s28 = scalar_select %p25, %s27, %s18
      %p29 = scmp.ge.s32.totalorder %s28, 2
      %s30 = scalar_select %p29, 0, %s28
      %s31 = ssub.s32 %s18, %s30
      %s32 = ssub.s32 %s19, %s26
      %s33 = sor.u32 %s31, %s32
      %p34 = scmp.eq.s32.totalorder %s33, 0
      %s36 = sadd.s32 %s35, 1
      %s37 = scalar_select %p34, %s35, %s36
      %p40 = pneg %p34
      %p41 = scmp.eq.s32.totalorder %s11, 1
      %p42 = por %p40, %p41
      %p43 = scmp.ne.s32.totalorder %s35, %s38
      %p44 = scmp.eq.s32.totalorder %s11, 0
      %p45 = por %p43, %p44
      %p46 = scmp.ne.s32.totalorder %s35, %s38
      %p47 = scmp.eq.s32.totalorder %s16, 1
      %p48 = por %p46, %p47
      %p49 = scmp.ne.s32.totalorder %s38, %s39
      %p50 = scmp.eq.s32.totalorder %s16, 0
      %p51 = por %p49, %p50
      %p52 = scmp.ne.s32.totalorder %s38, %s39
      %p53 = scmp.eq.s32.totalorder %s17, 1
      %p54 = por %p52, %p53
      %p56 = scmp.ne.s32.totalorder %s39, %s55
      %p57 = scmp.eq.s32.totalorder %s17, 0
      %p58 = por %p56, %p57
      %s59 = ssub.s32 %s18, %s30
      %s60 = ssub.s32 %s19, %s26
      %s61 = sor.u32 %s59, %s60
      %p62 = scmp.eq.s32.totalorder %s61, 0
      %s64 = sadd.s32 %s63, 1
      %s65 = scalar_select %p62, %s63, %s64
      %p68 = pneg %p62
      %p69 = scmp.eq.s32.totalorder %s11, 1
      %p70 = por %p68, %p69
      %p71 = scmp.ne.s32.totalorder %s63, %s66
      %p72 = scmp.eq.s32.totalorder %s11, 0
      %p73 = por %p71, %p72
      %p74 = scmp.ne.s32.totalorder %s63, %s66
      %p75 = scmp.eq.s32.totalorder %s16, 1
      %p76 = por %p74, %p75
      %p77 = scmp.ne.s32.totalorder %s66, %s67
      %p78 = scmp.eq.s32.totalorder %s16, 0
      %p79 = por %p77, %p78
      %p80 = scmp.ne.s32.totalorder %s66, %s67
      %p81 = scmp.eq.s32.totalorder %s17, 1
      %p82 = por %p80, %p81
      %p84 = scmp.ne.s32.totalorder %s67, %s83
      %p85 = scmp.eq.s32.totalorder %s17, 0
      %p86 = por %p84, %p85
      %s87 = ssub.s32 %s18, %s30
      %p88 = scmp.eq.s32.totalorder %s87, 0
      %s90 = sadd.s32 %s89, 1
      %s91 = scalar_select %p88, %s89, %s90
      %p94 = pneg %p88
      %p95 = scmp.eq.s32.totalorder %s11, 1
      %p96 = por %p94, %p95
      %p97 = scmp.ne.s32.totalorder %s89, %s92
      %p98 = scmp.eq.s32.totalorder %s11, 0
      %p99 = por %p97, %p98
      %p100 = scmp.ne.s32.totalorder %s89, %s92
      %p101 = scmp.eq.s32.totalorder %s16, 1
      %p102 = por %p100, %p101
      %p103 = scmp.ne.s32.totalorder %s92, %s93
      %p104 = scmp.eq.s32.totalorder %s16, 0
      %p105 = por %p103, %p104
      %p106 = scmp.ne.s32.totalorder %s92, %s93
      %p107 = scmp.eq.s32.totalorder %s17, 1
      %p108 = por %p106, %p107
      %p110 = scmp.ne.s32.totalorder %s93, %s109
      %p111 = scmp.eq.s32.totalorder %s17, 0
      %p112 = por %p110, %p111
      %p113 = scmp.le.s32.totalorder 1, %s11
      %p114 = scmp.lt.s32.totalorder %s11, 3
      %p115 = pnand %p113, %p114
      %p116 = pneg %p115
      // Predicated region
      $region9: #{_sp_acc_av_call.1} parent=5 // pred_check
        _
      $region10: #{_sp_acc_av_call.1} parent=5 // pred_check_branch
        %118 = sbr.rel (%p115) target = $region12
      $region11: #{_sp_acc_av_call.1} parent=5 // pred_region
        %s119 = ssub.s32 %s11, 1
      $region12: #{_sp_acc_av_call.1} parent=5 // pred_fallthru
        _
      %p120 = scmp.lt.s32.totalorder %s11, 2
      // Predicated region
      $region13: #{_sp_acc_av_call.1} parent=5 // pred_check
        %p121 = pneg %p120
      $region14: #{_sp_acc_av_call.1} parent=5 // pred_check_branch
        %123 = sbr.rel (%p121) target = $region16
      $region15: #{_sp_acc_av_call.1} parent=5 // pred_region
        // Predicated region
        $region17: #{_sp_acc_av_call.1} parent=15 // pred_check
          %p124 = pneg %p45
        $region18: #{_sp_acc_av_call.1} parent=15 // pred_check_branch
          %126 = sbr.rel (%p124) target = $region20
        $region19: #{_sp_acc_av_call.1} parent=15 // pred_region
          %s127 = smul.u32 2, %s19
          %p128 = scmp.lt.s32.totalorder %s18, 1
          %s129 = scalar_select %p128, %s18, 1
          %p130 = scmp.lt.s32.totalorder %s127, 1
          %s131 = scalar_select %p130, %s127, 1
          %s132 = smul.addr %s129, 2
          %s133 = sadd.s32 %s131, %s132
          %s134 = smul.addr %s133, 4
          %s135 = scalar_lea.vmem %s0, %s134
          %s136 = smul.u32 2, %s19
        $region20: #{_sp_acc_av_call.1} parent=15 // pred_fallthru
          _
        // Predicated region
        $region21: #{_sp_acc_av_call.1} parent=15 // pred_check
          %p137 = pneg %p73
        $region22: #{_sp_acc_av_call.1} parent=15 // pred_check_branch
          %139 = sbr.rel (%p137) target = $region24
        $region23: #{_sp_acc_av_call.1} parent=15 // pred_region
          %s140 = smul.u32 32, %s19
          %p141 = scmp.lt.s32.totalorder %s18, 1
          %s142 = scalar_select %p141, %s18, 1
          %p143 = scmp.lt.s32.totalorder %s140, 31
          %s144 = scalar_select %p143, %s140, 31
          %s145 = smul.addr %s142, 32
          %s146 = sadd.s32 %s144, %s145
          %s147 = smul.addr %s146, 8
          %s148 = scalar_lea.vmem %s1, %s147
          %s149 = smul.u32 32, %s19
        $region24: #{_sp_acc_av_call.1} parent=15 // pred_fallthru
          _
      $region16: #{_sp_acc_av_call.1} parent=5 // pred_fallthru
        _
      %p150 = scmp.le.s32.totalorder 1, %s11
      %p151 = scmp.lt.s32.totalorder %s11, 3
      %p152 = pnand %p150, %p151
      %p153 = pneg %p152
      // Predicated region
      $region25: #{_sp_acc_av_call.1} parent=5 // pred_check
        _
      $region26: #{_sp_acc_av_call.1} parent=5 // pred_check_branch
        %155 = sbr.rel (%p152) target = $region28
      $region27: #{_sp_acc_av_call.1} parent=5 // pred_region
        %s156 = ssub.s32 %s11, 1
        %s157 = smul.u32 2, %s21
        %p158 = scmp.lt.s32.totalorder %s20, 1
        %s159 = scalar_select %p158, %s20, 1
        %p160 = scmp.lt.s32.totalorder %s157, 1
        %s161 = scalar_select %p160, %s157, 1
        %s162 = smul.addr %s159, 2
        %s163 = sadd.s32 %s161, %s162
        %s164 = smul.addr %s163, 4
        %s165 = scalar_lea.vmem %s0, %s164
        %p166 = pneg %p51
        %p167 = pneg %p48
        %s168 = smul.u32 32, %s21
        %p169 = scmp.lt.s32.totalorder %s20, 1
        %s170 = scalar_select %p169, %s20, 1
        %p171 = scmp.lt.s32.totalorder %s168, 31
        %s172 = scalar_select %p171, %s168, 31
        %s173 = smul.addr %s170, 32
        %s174 = sadd.s32 %s172, %s173
        %s175 = smul.addr %s174, 8
        %s176 = scalar_lea.vmem %s1, %s175
        %p177 = pneg %p79
        %p178 = pneg %p76
        %p179 = pneg %p105
        %p180 = pneg %p102
        %s181 = sand.u32 %s92, 1
        %s182 = scalar_lea.sflag [#allocation5], %s181
        %s183 = sand.u32 %s92, 1
        %s184 = smul.addr %s183, 4
        %s185 = scalar_lea.vmem [#allocation4], %s184
        %s186 = smul.u32 2, %s21
        %p187 = scmp.lt.s32.totalorder %s20, 1
        %s188 = scalar_select %p187, %s20, 1
        %p189 = scmp.lt.s32.totalorder %s186, 1
        %s190 = scalar_select %p189, %s186, 1
        %s191 = smul.addr %s188, 2
        %s192 = sadd.s32 %s190, %s191
        %s193 = smul.addr %s192, 4
        %s194 = scalar_lea.vmem %s0, %s193
        %s195 = smul.u32 2, %s21
        %s196 = smul.u32 32, %s21
        %p197 = scmp.lt.s32.totalorder %s20, 1
        %s198 = scalar_select %p197, %s20, 1
        %p199 = scmp.lt.s32.totalorder %s196, 31
        %s200 = scalar_select %p199, %s196, 31
        %s201 = smul.addr %s198, 32
        %s202 = sadd.s32 %s200, %s201
        %s203 = smul.addr %s202, 8
        %s204 = scalar_lea.vmem %s1, %s203
        %s205 = smul.u32 32, %s21
        %p208 = scmp.eq.s32.totalorder %s21, 0
        // Predicated region
        $region29: #{_sp_acc_av_call.1} parent=27 // pred_check
          %p209 = pneg %p208
        $region30: #{_sp_acc_av_call.1} parent=27 // pred_check_branch
          %211 = sbr.rel (%p209) target = $region32
        $region31: #{_sp_acc_av_call.1} parent=27 // pred_region
          %212 = vst [vmem:[#allocation2] sm:$0xf] 0.0
          %213 = vst [vmem:[#allocation3] sm:$0x1] 0.0
        $region32: #{_sp_acc_av_call.1} parent=27 // pred_fallthru
          _
        %v214 = vld [vmem:[%s194] sm:$0xff]
        %v216 = vcombine.high %v214, %v214
        %v218 = vpack.c.bf16 %v214, %v214
        %v219 = vpack.c.bf16 %v216, %v216
        %v220 = vld [vmem:[%s204] sm:$0xff]
        %v221 = vld [vmem:[%s204 + $0x8] sm:$0xff]
        %v222 = vld [vmem:[%s204 + $0x10] sm:$0xff]
        %v223 = vld [vmem:[%s204 + $0x18] sm:$0xff]
        %v224 = vld [vmem:[%s204 + $0x20] sm:$0xff]
        %v225 = vld [vmem:[%s204 + $0x28] sm:$0xff]
        %v226 = vld [vmem:[%s204 + $0x30] sm:$0xff]
        %v227 = vld [vmem:[%s204 + $0x38] sm:$0xff]
        %v228 = vld [vmem:[%s204 + $0x40] sm:$0xff]
        %v229 = vld [vmem:[%s204 + $0x48] sm:$0xff]
        %v230 = vld [vmem:[%s204 + $0x50] sm:$0xff]
        %v231 = vld [vmem:[%s204 + $0x58] sm:$0xff]
        %v232 = vld [vmem:[%s204 + $0x60] sm:$0xff]
        %v233 = vld [vmem:[%s204 + $0x68] sm:$0xff]
        %v234 = vld [vmem:[%s204 + $0x70] sm:$0xff]
        %v235 = vld [vmem:[%s204 + $0x78] sm:$0xff]
        %v236 = vld [vmem:[%s204 + $0x80] sm:$0xff]
        %v237 = vld [vmem:[%s204 + $0x88] sm:$0xff]
        %v238 = vld [vmem:[%s204 + $0x90] sm:$0xff]
        %v239 = vld [vmem:[%s204 + $0x98] sm:$0xff]
        %v240 = vld [vmem:[%s204 + $0xa0] sm:$0xff]
        %v241 = vld [vmem:[%s204 + $0xa8] sm:$0xff]
        %v242 = vld [vmem:[%s204 + $0xb0] sm:$0xff]
        %v243 = vld [vmem:[%s204 + $0xb8] sm:$0xff]
        %v244 = vld [vmem:[%s204 + $0xc0] sm:$0xff]
        %v245 = vld [vmem:[%s204 + $0xc8] sm:$0xff]
        %v246 = vld [vmem:[%s204 + $0xd0] sm:$0xff]
        %v247 = vld [vmem:[%s204 + $0xd8] sm:$0xff]
        %v248 = vld [vmem:[%s204 + $0xe0] sm:$0xff]
        %v249 = vld [vmem:[%s204 + $0xe8] sm:$0xff]
        %v250 = vld [vmem:[%s204 + $0xf0] sm:$0xff]
        %v251 = vld [vmem:[%s204 + $0xf8] sm:$0xff]
        %v252 = vlaneseq
        %v253 = vand.u32 %v252, 127
        %254 = vset.pattern.permute.xlu0 0
        %255 = vperm.xlu0 %254, %v220
        %v256 = vpop.permute.xlu0 %255
        %257 = vset.pattern.permute.xlu0 0
        %258 = vperm.xlu0 %257, %v221
        %v259 = vpop.permute.xlu0 %258
        %260 = vset.pattern.permute.xlu0 0
        %261 = vperm.xlu0 %260, %v222
        %v262 = vpop.permute.xlu0 %261
        %263 = vset.pattern.permute.xlu0 0
        %264 = vperm.xlu0 %263, %v223
        %v265 = vpop.permute.xlu0 %264
        %266 = vset.pattern.permute.xlu0 0
        %267 = vperm.xlu0 %266, %v224
        %v268 = vpop.permute.xlu0 %267
        %269 = vset.pattern.permute.xlu0 0
        %270 = vperm.xlu0 %269, %v225
        %v271 = vpop.permute.xlu0 %270
        %272 = vset.pattern.permute.xlu0 0
        %273 = vperm.xlu0 %272, %v226
        %v274 = vpop.permute.xlu0 %273
        %275 = vset.pattern.permute.xlu0 0
        %276 = vperm.xlu0 %275, %v227
        %v277 = vpop.permute.xlu0 %276
        %278 = vset.pattern.permute.xlu0 0
        %279 = vperm.xlu0 %278, %v228
        %v280 = vpop.permute.xlu0 %279
        %281 = vset.pattern.permute.xlu0 0
        %282 = vperm.xlu0 %281, %v229
        %v283 = vpop.permute.xlu0 %282
        %284 = vset.pattern.permute.xlu0 0
        %285 = vperm.xlu0 %284, %v230
        %v286 = vpop.permute.xlu0 %285
        %287 = vset.pattern.permute.xlu0 0
        %288 = vperm.xlu0 %287, %v231
        %v289 = vpop.permute.xlu0 %288
        %290 = vset.pattern.permute.xlu0 0
        %291 = vperm.xlu0 %290, %v232
        %v292 = vpop.permute.xlu0 %291
        %293 = vset.pattern.permute.xlu0 0
        %294 = vperm.xlu0 %293, %v233
        %v295 = vpop.permute.xlu0 %294
        %296 = vset.pattern.permute.xlu0 0
        %297 = vperm.xlu0 %296, %v234
        %v298 = vpop.permute.xlu0 %297
        %299 = vset.pattern.permute.xlu0 0
        %300 = vperm.xlu0 %299, %v235
        %v301 = vpop.permute.xlu0 %300
        %302 = vset.pattern.permute.xlu0 0
        %303 = vperm.xlu0 %302, %v236
        %v304 = vpop.permute.xlu0 %303
        %305 = vset.pattern.permute.xlu0 0
        %306 = vperm.xlu0 %305, %v237
        %v307 = vpop.permute.xlu0 %306
        %308 = vset.pattern.permute.xlu0 0
        %309 = vperm.xlu0 %308, %v238
        %v310 = vpop.permute.xlu0 %309
        %311 = vset.pattern.permute.xlu0 0
        %312 = vperm.xlu0 %311, %v239
        %v313 = vpop.permute.xlu0 %312
        %314 = vset.pattern.permute.xlu0 0
        %315 = vperm.xlu0 %314, %v240
        %v316 = vpop.permute.xlu0 %315
        %317 = vset.pattern.permute.xlu0 0
        %318 = vperm.xlu0 %317, %v241
        %v319 = vpop.permute.xlu0 %318
        %320 = vset.pattern.permute.xlu0 0
        %321 = vperm.xlu0 %320, %v242
        %v322 = vpop.permute.xlu0 %321
        %323 = vset.pattern.permute.xlu0 0
        %324 = vperm.xlu0 %323, %v243
        %v325 = vpop.permute.xlu0 %324
        %326 = vset.pattern.permute.xlu0 0
        %327 = vperm.xlu0 %326, %v244
        %v328 = vpop.permute.xlu0 %327
        %329 = vset.pattern.permute.xlu0 0
        %330 = vperm.xlu0 %329, %v245
        %v331 = vpop.permute.xlu0 %330
        %332 = vset.pattern.permute.xlu0 0
        %333 = vperm.xlu0 %332, %v246
        %v334 = vpop.permute.xlu0 %333
        %335 = vset.pattern.permute.xlu0 0
        %336 = vperm.xlu0 %335, %v247
        %v337 = vpop.permute.xlu0 %336
        %338 = vset.pattern.permute.xlu0 0
        %339 = vperm.xlu0 %338, %v248
        %v340 = vpop.permute.xlu0 %339
        %341 = vset.pattern.permute.xlu0 0
        %342 = vperm.xlu0 %341, %v249
        %v343 = vpop.permute.xlu0 %342
        %344 = vset.pattern.permute.xlu0 0
        %345 = vperm.xlu0 %344, %v250
        %v346 = vpop.permute.xlu0 %345
        %347 = vset.pattern.permute.xlu0 0
        %348 = vperm.xlu0 %347, %v251
        %v349 = vpop.permute.xlu0 %348
        %vm350 = vcmp.eq.s32.totalorder %v256, %v253
        %vm351 = vcmp.eq.s32.totalorder %v259, %v253
        %vm352 = vcmp.eq.s32.totalorder %v262, %v253
        %vm353 = vcmp.eq.s32.totalorder %v265, %v253
        %vm354 = vcmp.eq.s32.totalorder %v268, %v253
        %vm355 = vcmp.eq.s32.totalorder %v271, %v253
        %vm356 = vcmp.eq.s32.totalorder %v274, %v253
        %vm357 = vcmp.eq.s32.totalorder %v277, %v253
        %vm358 = vcmp.eq.s32.totalorder %v280, %v253
        %vm359 = vcmp.eq.s32.totalorder %v283, %v253
        %vm360 = vcmp.eq.s32.totalorder %v286, %v253
        %vm361 = vcmp.eq.s32.totalorder %v289, %v253
        %vm362 = vcmp.eq.s32.totalorder %v292, %v253
        %vm363 = vcmp.eq.s32.totalorder %v295, %v253
        %vm364 = vcmp.eq.s32.totalorder %v298, %v253
        %vm365 = vcmp.eq.s32.totalorder %v301, %v253
        %vm366 = vcmp.eq.s32.totalorder %v304, %v253
        %vm367 = vcmp.eq.s32.totalorder %v307, %v253
        %vm368 = vcmp.eq.s32.totalorder %v310, %v253
        %vm369 = vcmp.eq.s32.totalorder %v313, %v253
        %vm370 = vcmp.eq.s32.totalorder %v316, %v253
        %vm371 = vcmp.eq.s32.totalorder %v319, %v253
        %vm372 = vcmp.eq.s32.totalorder %v322, %v253
        %vm373 = vcmp.eq.s32.totalorder %v325, %v253
        %vm374 = vcmp.eq.s32.totalorder %v328, %v253
        %vm375 = vcmp.eq.s32.totalorder %v331, %v253
        %vm376 = vcmp.eq.s32.totalorder %v334, %v253
        %vm377 = vcmp.eq.s32.totalorder %v337, %v253
        %vm378 = vcmp.eq.s32.totalorder %v340, %v253
        %vm379 = vcmp.eq.s32.totalorder %v343, %v253
        %vm380 = vcmp.eq.s32.totalorder %v346, %v253
        %vm381 = vcmp.eq.s32.totalorder %v349, %v253
        %v382 = vsel %vm350, 1, 0
        %v383 = vsel %vm351, 1, 0
        %v384 = vsel %vm352, 1, 0
        %v385 = vsel %vm353, 1, 0
        %v386 = vsel %vm354, 1, 0
        %v387 = vsel %vm355, 1, 0
        %v388 = vsel %vm356, 1, 0
        %v389 = vsel %vm357, 1, 0
        %v390 = vsel %vm358, 1, 0
        %v391 = vsel %vm359, 1, 0
        %v392 = vsel %vm360, 1, 0
        %v393 = vsel %vm361, 1, 0
        %v394 = vsel %vm362, 1, 0
        %v395 = vsel %vm363, 1, 0
        %v396 = vsel %vm364, 1, 0
        %v397 = vsel %vm365, 1, 0
        %v398 = vsel %vm366, 1, 0
        %v399 = vsel %vm367, 1, 0
        %v400 = vsel %vm368, 1, 0
        %v401 = vsel %vm369, 1, 0
        %v402 = vsel %vm370, 1, 0
        %v403 = vsel %vm371, 1, 0
        %v404 = vsel %vm372, 1, 0
        %v405 = vsel %vm373, 1, 0
        %v406 = vsel %vm374, 1, 0
        %v407 = vsel %vm375, 1, 0
        %v408 = vsel %vm376, 1, 0
        %v409 = vsel %vm377, 1, 0
        %v410 = vsel %vm378, 1, 0
        %v411 = vsel %vm379, 1, 0
        %v412 = vsel %vm380, 1, 0
        %v413 = vsel %vm381, 1, 0
        %v414 = vcvt.s32.f32 %v382
        %v415 = vcvt.s32.f32 %v383
        %v416 = vcvt.s32.f32 %v384
        %v417 = vcvt.s32.f32 %v385
        %v418 = vcvt.s32.f32 %v386
        %v419 = vcvt.s32.f32 %v387
        %v420 = vcvt.s32.f32 %v388
        %v421 = vcvt.s32.f32 %v389
        %v422 = vcvt.s32.f32 %v390
        %v423 = vcvt.s32.f32 %v391
        %v424 = vcvt.s32.f32 %v392
        %v425 = vcvt.s32.f32 %v393
        %v426 = vcvt.s32.f32 %v394
        %v427 = vcvt.s32.f32 %v395
        %v428 = vcvt.s32.f32 %v396
        %v429 = vcvt.s32.f32 %v397
        %v430 = vcvt.s32.f32 %v398
        %v431 = vcvt.s32.f32 %v399
        %v432 = vcvt.s32.f32 %v400
        %v433 = vcvt.s32.f32 %v401
        %v434 = vcvt.s32.f32 %v402
        %v435 = vcvt.s32.f32 %v403
        %v436 = vcvt.s32.f32 %v404
        %v437 = vcvt.s32.f32 %v405
        %v438 = vcvt.s32.f32 %v406
        %v439 = vcvt.s32.f32 %v407
        %v440 = vcvt.s32.f32 %v408
        %v441 = vcvt.s32.f32 %v409
        %v442 = vcvt.s32.f32 %v410
        %v443 = vcvt.s32.f32 %v411
        %v444 = vcvt.s32.f32 %v412
        %v445 = vcvt.s32.f32 %v413
        %v446 = vpack.c.bf16 %v415, %v414
        %v447 = vpack.c.bf16 %v417, %v416
        %v448 = vpack.c.bf16 %v419, %v418
        %v449 = vpack.c.bf16 %v421, %v420
        %v450 = vpack.c.bf16 %v423, %v422
        %v451 = vpack.c.bf16 %v425, %v424
        %v452 = vpack.c.bf16 %v427, %v426
        %v453 = vpack.c.bf16 %v429, %v428
        %v454 = vpack.c.bf16 %v431, %v430
        %v455 = vpack.c.bf16 %v433, %v432
        %v456 = vpack.c.bf16 %v435, %v434
        %v457 = vpack.c.bf16 %v437, %v436
        %v458 = vpack.c.bf16 %v439, %v438
        %v459 = vpack.c.bf16 %v441, %v440
        %v460 = vpack.c.bf16 %v443, %v442
        %v461 = vpack.c.bf16 %v445, %v444
        %v462 = vld [vmem:[#allocation2] sm:$0xf]
        %463 = vmatprep.subr.bf16.mxu0 0
        %464 = vmatpush1.bf16.msra.mxu0 %v453
        %465 = vmatprep.subr.bf16.mxu0 0
        %466 = vmatpush1.bf16.msra.mxu0 %v452
        %467 = vmatprep.subr.bf16.mxu0 0
        %468 = vmatpush1.bf16.msra.mxu0 %v451
        %469 = vmatprep.subr.bf16.mxu0 0
        %470 = vmatpush1.bf16.msra.mxu0 %v450
        %471 = vmatprep.subr.bf16.mxu0 0
        %472 = vmatpush1.bf16.msra.mxu0 %v449
        %473 = vmatprep.subr.bf16.mxu0 0
        %474 = vmatpush1.bf16.msra.mxu0 %v448
        %475 = vmatprep.subr.bf16.mxu0 0
        %476 = vmatpush1.bf16.msra.mxu0 %v447
        %477 = vmatprep.subr.bf16.mxu0 0
        %478 = vmatpush1.bf16.msra.mxu0 %v446
        %479 = vmatprep.subr.bf16.mxu0 0
        %480 = vmatpush2.bf16.msra.mxu0 %v461
        %481 = vmatprep.subr.bf16.mxu0 0
        %482 = vmatpush2.bf16.msra.mxu0 %v460
        %483 = vmatprep.subr.bf16.mxu0 0
        %484 = vmatpush2.bf16.msra.mxu0 %v459
        %485 = vmatprep.subr.bf16.mxu0 0
        %486 = vmatpush2.bf16.msra.mxu0 %v458
        %487 = vmatprep.subr.bf16.mxu0 0
        %488 = vmatpush2.bf16.msra.mxu0 %v457
        %489 = vmatprep.subr.bf16.mxu0 0
        %490 = vmatpush2.bf16.msra.mxu0 %v456
        %491 = vmatprep.subr.bf16.mxu0 0
        %492 = vmatpush2.bf16.msra.mxu0 %v455
        %493 = vmatprep.subr.bf16.mxu0 0
        %494 = vmatpush2.bf16.msra.mxu0 %v454
        %495 = vmatprep.mubr.bf16.mxu0 %v219
        %496 = vmatmul.mubr.bf16.gmra.mxu0 %v218
        %v497 = vpop.f32.mrf.mxu0
        %v498 = vadd.f32 0.0, %v497
        %v499 = vpop.f32.mrf.mxu0
        %v500 = vpop.f32.mrf.mxu0
        %v501 = vpop.f32.mrf.mxu0
        %502 = vdwg.mxu0
        %v503 = vadd.f32 %v462, %v498
        %504 = vst [vmem:[#allocation2] sm:$0xf] %v503
        %v505 = vld [vmem:[#allocation3] sm:$0x1]
        %506 = vmatprep.subr.bf16.mxu0 0
        %507 = vmatpush1.bf16.msra.mxu0 %v453
        %508 = vmatprep.subr.bf16.mxu0 0
        %509 = vmatpush1.bf16.msra.mxu0 %v452
        %510 = vmatprep.subr.bf16.mxu0 0
        %511 = vmatpush1.bf16.msra.mxu0 %v451
        %512 = vmatprep.subr.bf16.mxu0 0
        %513 = vmatpush1.bf16.msra.mxu0 %v450
        %514 = vmatprep.subr.bf16.mxu0 0
        %515 = vmatpush1.bf16.msra.mxu0 %v449
        %516 = vmatprep.subr.bf16.mxu0 0
        %517 = vmatpush1.bf16.msra.mxu0 %v448
        %518 = vmatprep.subr.bf16.mxu0 0
        %519 = vmatpush1.bf16.msra.mxu0 %v447
        %520 = vmatprep.subr.bf16.mxu0 0
        %521 = vmatpush1.bf16.msra.mxu0 %v446
        %522 = vmatprep.subr.bf16.mxu0 0
        %523 = vmatpush2.bf16.msra.mxu0 %v461
        %524 = vmatprep.subr.bf16.mxu0 0
        %525 = vmatpush2.bf16.msra.mxu0 %v460
        %526 = vmatprep.subr.bf16.mxu0 0
        %527 = vmatpush2.bf16.msra.mxu0 %v459
        %528 = vmatprep.subr.bf16.mxu0 0
        %529 = vmatpush2.bf16.msra.mxu0 %v458
        %530 = vmatprep.subr.bf16.mxu0 0
        %531 = vmatpush2.bf16.msra.mxu0 %v457
        %532 = vmatprep.subr.bf16.mxu0 0
        %533 = vmatpush2.bf16.msra.mxu0 %v456
        %534 = vmatprep.subr.bf16.mxu0 0
        %535 = vmatpush2.bf16.msra.mxu0 %v455
        %536 = vmatprep.subr.bf16.mxu0 0
        %537 = vmatpush2.bf16.msra.mxu0 %v454
        %538 = vmatprep.mubr.bf16.mxu0 1065369472
        %539 = vmatmul.mubr.bf16.gmra.mxu0 1065369472
        %v540 = vpop.f32.mrf.mxu0
        %v541 = vadd.f32 0.0, %v540
        %v542 = vpop.f32.mrf.mxu0
        %v543 = vpop.f32.mrf.mxu0
        %v544 = vpop.f32.mrf.mxu0
        %545 = vdwg.mxu0
        %v546 = vadd.f32 %v505, %v541
        %547 = vst [vmem:[#allocation3] sm:$0x1] %v546
        // Predicated region
        $region33: #{_sp_acc_av_call.1} parent=27 // pred_check
          %p548 = pneg %p208
        $region34: #{_sp_acc_av_call.1} parent=27 // pred_check_branch
          %550 = sbr.rel (%p548) target = $region36
        $region35: #{_sp_acc_av_call.1} parent=27 // pred_region
          %v551 = vld [vmem:[#allocation3] sm:$0x1]
          %vm552 = vcmp.gt.f32.partialorder %v551, 0.0
          %v553 = vmax.f32 %v551, 1.0
          %v554 = vrcp.pop %v553
          %v555 = vmul.f32 1.0, %v554
          %v556 = vsel %vm552, %v555, 0.0
          %v557 = vld [vmem:[#allocation2] sm:$0xf]
          %v559 = vlaneseq
          %v560 = vshrl.u32 %v559, 7
          %v561 = vsub.s32 0, %v560
          %v562 = vrot.slane %v556, %v561
          %v564 = vmul.f32 %v557, %v562
          %565 = vst [vmem:[%s185] sm:$0xf] %v564
        $region36: #{_sp_acc_av_call.1} parent=27 // pred_fallthru
          _
        %s566 = sand.u32 %s92, 1
        %s567 = scalar_lea.sflag [#allocation5], %s566
        %s568 = sand.u32 %s92, 1
        %s569 = smul.addr %s568, 4
        %s570 = scalar_lea.vmem [#allocation4], %s569
        // Predicated region
        $region37: #{_sp_acc_av_call.1} parent=27 // pred_check
          %p571 = pneg %p102
        $region38: #{_sp_acc_av_call.1} parent=27 // pred_check_branch
          %573 = sbr.rel (%p571) target = $region40
        $region39: #{_sp_acc_av_call.1} parent=27 // pred_region
          %s575 = ssub.s32 64, 64
          %576 = vsyncadd %s567, %s575
          %s577 = smul.addr %s20, 64
          %s578 = scalar_lea.hbm %s2, %s577
          %s580 = sshll.u32 %s570, 4
          %s581 = int_to_ptr.vmem [resolvable:$true] %s580
          %583 = dma.vmem_to_hbm [thread:$0]  %s581, 64, %s578, %s567
        $region40: #{_sp_acc_av_call.1} parent=27 // pred_fallthru
          _
      $region28: #{_sp_acc_av_call.1} parent=5 // pred_fallthru
        _
      %p584 = scmp.le.s32.totalorder 2, %s11
      // Predicated region
      $region41: #{_sp_acc_av_call.1} parent=5 // pred_check
        %p585 = pneg %p584
      $region42: #{_sp_acc_av_call.1} parent=5 // pred_check_branch
        %587 = sbr.rel (%p585) target = $region44
      $region43: #{_sp_acc_av_call.1} parent=5 // pred_region
        %s588 = ssub.s32 %s11, 2
        // Predicated region
        $region45: #{_sp_acc_av_call.1} parent=43 // pred_check
          %p589 = pneg %p108
        $region46: #{_sp_acc_av_call.1} parent=43 // pred_check_branch
          %591 = sbr.rel (%p589) target = $region48
        $region47: #{_sp_acc_av_call.1} parent=43 // pred_region
          %s592 = sand.u32 %s93, 1
          %s593 = scalar_lea.sflag [#allocation5], %s592
          %s594 = sand.u32 %s93, 1
          %s595 = smul.addr %s594, 4
          %s596 = scalar_lea.vmem [#allocation4], %s595
          %597 = dma.done %s593, 64
        $region48: #{_sp_acc_av_call.1} parent=43 // pred_fallthru
          _
      $region44: #{_sp_acc_av_call.1} parent=5 // pred_fallthru
        _
    $region6: #{_sp_acc_av_call.1} parent=1 // loop_footer
      %s15 = sadd.s32 1, %s11
    $region7: #{_sp_acc_av_call.1} parent=1 // loop_footer_branch
      %10 = sbr.rel target = $region3
    $region8: #{_sp_acc_av_call.1} parent=1 // loop_exit
      _
    %598 = vsyncpa [#allocation5], 1
    %s599 = scalar_lea.sflag [#allocation5], 1
    %600 = vsyncpa %s599, 1

</llo_original>
